<compile_context>
chip_gen: v5e
topology: v5e:2x2
jax: 0.10.0
libtpu: 0.0.40
codegen_flags: <defaults>
</compile_context>

<pallas_src>
import functools

import jax
import jax.numpy as jnp
from jax.experimental import pallas as pl
from jax.experimental.pallas import tpu as pltpu


def _round_up(x: int, m: int) -> int:
    return (x + m - 1) // m * m


def _mlp_kernel(x_ref, w1_ref, b1_ref, w2_ref, b2_ref, w3t8_ref, b3_ref, o_ref):
    # Layer 1: (TB, S) @ (S, H1p) on MXU with bf16 operands, f32 accumulation.
    x_bf = x_ref[...].astype(jnp.bfloat16)
    h1 = jnp.dot(x_bf, w1_ref[...], preferred_element_type=jnp.float32)
    h1 = jnp.maximum(h1 + b1_ref[...], 0.0)

    # Layer 2: (TB, H1p) @ (H1p, H2p) on MXU, bf16 operands, f32 accumulation.
    h2 = jnp.dot(h1.astype(jnp.bfloat16), w2_ref[...],
                 preferred_element_type=jnp.float32)
    h2 = jnp.maximum(h2 + b2_ref[...], 0.0)

    # Layer 3 (single output unit): contract the w3 row-slab (8, H2p) with h2
    # (TB, H2p) on the feature dim -> (8, TB); rows 1..7 of the slab are zero,
    # so a sublane-sum recovers the real logits as a lane-dense (1, TB) row.
    z = jax.lax.dot_general(
        w3t8_ref[...], h2,
        dimension_numbers=(((1,), (1,)), ((), ())),
        preferred_element_type=jnp.float32)
    logits = jnp.sum(z, axis=0, keepdims=True) + b3_ref[0, 0]   # (1, TB)

    o_ref[...] = jax.nn.sigmoid(logits)[None].astype(o_ref.dtype)


def pad_params(w1, b1, w2, b2, w3, b3):
    """Pad weight *output* columns to lane multiples of 128; store matmul
    weights in bf16.  x's feature dim (layer-1 K) is left unpadded."""
    S, H1 = w1.shape
    H2 = w2.shape[1]
    H1p, H2p = _round_up(H1, 128), _round_up(H2, 128)
    w1p = jnp.pad(w1, ((0, 0), (0, H1p - H1))).astype(jnp.bfloat16)   # (S, H1p)
    b1p = jnp.pad(b1, ((0, 0), (0, H1p - H1)))                        # f32
    w2p = jnp.pad(w2, ((0, H1p - H1), (0, H2p - H2))).astype(jnp.bfloat16)
    b2p = jnp.pad(b2, ((0, 0), (0, H2p - H2)))
    # Layer-3 weight as an 8-sublane slab: row 0 = w3^T (padded), rows 1..7 = 0.
    w3t8 = jnp.zeros((8, H2p), jnp.float32).at[0, :H2].set(w3[:, 0])
    b3s = b3.reshape(1, 1)
    return (w1p, b1p, w2p, b2p, w3t8, b3s)


def _pick_tb(B: int, block_b: int) -> int:
    """Batch-tile rows: multiple of 8, <= block_b, >=2 grid steps when the
    batch allows (v7x megacore), preferring a divisor of the 8-aligned batch
    so no batch padding / x copy is needed."""
    bp8 = _round_up(max(B, 1), 8)
    cap = min(_round_up(block_b, 8), bp8)
    if bp8 >= 16:
        cap = min(cap, _round_up((bp8 + 1) // 2, 8))
    best = 8
    for cand in range(8, cap + 1, 8):
        if bp8 % cand == 0:
            best = cand
    return best if best * 2 >= cap else cap


@functools.partial(jax.jit, static_argnames=("block_b",))
def net_forward(x, padded_params, *, block_b=1024):
    """Fused forward pass.  x: (B, state_space) f32 -> (B, 1) f32."""
    w1p, b1p, w2p, b2p, w3t8, b3s = padded_params
    B, S = x.shape
    H1p = w1p.shape[1]
    H2p = w2p.shape[1]

    TB = _pick_tb(B, block_b)
    Bp = _round_up(B, TB)
    G = Bp // TB
    if Bp != B:  # rare fallback: pad the batch tail (static-shape decision)
        x = jnp.pad(x, ((0, Bp - B), (0, 0)))

    out = pl.pallas_call(
        _mlp_kernel,
        out_shape=jax.ShapeDtypeStruct((G, 1, TB), jnp.float32),
        grid=(G,),
        in_specs=[
            pl.BlockSpec((TB, S), lambda i: (i, 0)),       # x tile (unpadded K)
            pl.BlockSpec((S, H1p), lambda i: (0, 0)),      # resident bf16 W1
            pl.BlockSpec((1, H1p), lambda i: (0, 0)),      # b1 (f32)
            pl.BlockSpec((H1p, H2p), lambda i: (0, 0)),    # resident bf16 W2
            pl.BlockSpec((1, H2p), lambda i: (0, 0)),      # b2 (f32)
            pl.BlockSpec((8, H2p), lambda i: (0, 0)),      # w3 row-slab (f32)
            pl.BlockSpec(memory_space=pltpu.MemorySpace.SMEM),  # b3 scalar
        ],
        out_specs=pl.BlockSpec((1, 1, TB), lambda i: (i, 0, 0)),  # lane-dense row
        compiler_params=pltpu.CompilerParams(
            dimension_semantics=("parallel",),
        ),
    )(x, w1p, b1p, w2p, b2p, w3t8, b3s)
    return out.reshape(Bp, 1)[:B]


def init_params(key, num_stocks):
    """Deterministic PyTorch-style (uniform +-1/sqrt(fan_in)) initialization."""
    state_space = num_stocks * (num_stocks + 1) // 2
    hidden = num_stocks * num_stocks + 1
    hidden2 = (num_stocks * num_stocks + 1) // 8
    action_space = 1

    def linear(key, fan_in, fan_out):
        kw, kb = jax.random.split(key)
        bound = 1.0 / jnp.sqrt(float(fan_in))
        # stored as (in, out) -- already transposed vs. torch's (out, in)
        w = jax.random.uniform(kw, (fan_in, fan_out), jnp.float32, -bound, bound)
        b = jax.random.uniform(kb, (1, fan_out), jnp.float32, -bound, bound)
        return w, b

    k1, k2, k3 = jax.random.split(key, 3)
    w1, b1 = linear(k1, state_space, hidden)
    w2, b2 = linear(k2, hidden, hidden2)
    w3, b3 = linear(k3, hidden2, action_space)
    return (w1, b1, w2, b2, w3, b3), state_space


def reference_forward(x, w1, b1, w2, b2, w3, b3):
    h1 = jnp.maximum(x @ w1 + b1, 0.0)
    h2 = jnp.maximum(h1 @ w2 + b2, 0.0)
    return jax.nn.sigmoid(h2 @ w3 + b3)


if __name__ == "__main__":
    num_stocks = 16          # state_space=136, hidden=257, hidden2=32, out=1
    batch = 32               # small demo batch

    key = jax.random.PRNGKey(0)
    kp, kx = jax.random.split(key)
    params, state_space = init_params(kp, num_stocks)
    x = jax.random.normal(kx, (batch, state_space), jnp.float32)

    padded_params = pad_params(*params)              # pad/cast weights once
    ref = reference_forward(x, *params)

    # Small tiles -> exercises a 4-step grid.
    out_small = jax.block_until_ready(net_forward(x, padded_params, block_b=8))
    # Default tiles -> TB capped at ceil(B/2)=16, 2-step grid (v7x megacore path).
    out_big = jax.block_until_ready(net_forward(x, padded_params))

    assert out_small.shape == (batch, 1), out_small.shape
    assert out_big.shape == (batch, 1), out_big.shape
    # bf16 matmul operands -> relaxed tolerance vs. the f32 reference.
    assert jnp.allclose(out_small, ref, atol=1e-2, rtol=1e-2)
    assert jnp.allclose(out_big, ref, atol=1e-2, rtol=1e-2)

    print("KERNEL_OK")
</pallas_src>

<mosaic_0001>
module attributes {stable_mosaic.version = 11 : i64} {
  func.func @_mlp_kernel(%arg0: i32, %arg1: memref<8x136xf32, #tpu.memory_space<vmem>>, %arg2: memref<136x384xbf16, #tpu.memory_space<vmem>>, %arg3: memref<1x384xf32, #tpu.memory_space<vmem>>, %arg4: memref<384x128xbf16, #tpu.memory_space<vmem>>, %arg5: memref<1x128xf32, #tpu.memory_space<vmem>>, %arg6: memref<8x128xf32, #tpu.memory_space<vmem>>, %arg7: memref<1x1xf32, #tpu.memory_space<smem>>, %arg8: memref<1x1x8xf32, #tpu.memory_space<vmem>>) attributes {dimension_semantics = [#tpu.dimension_semantics<parallel>], iteration_bounds = array<i64: 4>, scalar_prefetch = 0 : i64, scratch_operands = 0 : i64, tpu.core_type = #tpu.core_type<tc>, window_params = [{transform_indices = @transform_0, window_bounds = array<i64: 8, 136>}, {pipeline_mode = #tpu.pipeline_mode<synchronous>, transform_indices = @transform_1, window_bounds = array<i64: 136, 384>}, {pipeline_mode = #tpu.pipeline_mode<synchronous>, transform_indices = @transform_2, window_bounds = array<i64: 1, 384>}, {pipeline_mode = #tpu.pipeline_mode<synchronous>, transform_indices = @transform_3, window_bounds = array<i64: 384, 128>}, {pipeline_mode = #tpu.pipeline_mode<synchronous>, transform_indices = @transform_4, window_bounds = array<i64: 1, 128>}, {pipeline_mode = #tpu.pipeline_mode<synchronous>, transform_indices = @transform_5, window_bounds = array<i64: 8, 128>}, {transform_indices = @transform_6, window_bounds = array<i64: 1, 1>}, {transform_indices = @transform_7, window_bounds = array<i64: 1, 1, 8>}]} {
    %c0 = arith.constant 0 : index
    %c0_0 = arith.constant 0 : index
    %0 = vector.load %arg1[%c0, %c0_0] : memref<8x136xf32, #tpu.memory_space<vmem>>, vector<8x136xf32>
    %1 = arith.truncf %0 : vector<8x136xf32> to vector<8x136xbf16>
    %c0_1 = arith.constant 0 : index
    %c0_2 = arith.constant 0 : index
    %2 = vector.load %arg2[%c0_1, %c0_2] : memref<136x384xbf16, #tpu.memory_space<vmem>>, vector<136x384xbf16>
    %cst = arith.constant dense<0.000000e+00> : vector<8x384xf32>
    %3 = tpu.matmul %1, %2, %cst {dimension_numbers = #tpu.dot_dimension_numbers<[1], [0], [0], [1], [0, 0, 1, 1], [], []>} : vector<8x136xbf16>, vector<136x384xbf16>, vector<8x384xf32> -> vector<8x384xf32>
    %c0_3 = arith.constant 0 : index
    %c0_4 = arith.constant 0 : index
    %4 = vector.load %arg3[%c0_3, %c0_4] : memref<1x384xf32, #tpu.memory_space<vmem>>, vector<1x384xf32>
    %5 = vector.broadcast %4 : vector<1x384xf32> to vector<8x384xf32>
    %6 = arith.addf %3, %5 : vector<8x384xf32>
    %cst_5 = arith.constant 0.000000e+00 : f32
    %7 = vector.broadcast %cst_5 : f32 to vector<8x384xf32>
    %8 = arith.maximumf %6, %7 : vector<8x384xf32>
    %9 = arith.truncf %8 : vector<8x384xf32> to vector<8x384xbf16>
    %c0_6 = arith.constant 0 : index
    %c0_7 = arith.constant 0 : index
    %10 = vector.load %arg4[%c0_6, %c0_7] : memref<384x128xbf16, #tpu.memory_space<vmem>>, vector<384x128xbf16>
    %cst_8 = arith.constant dense<0.000000e+00> : vector<8x128xf32>
    %11 = tpu.matmul %9, %10, %cst_8 {dimension_numbers = #tpu.dot_dimension_numbers<[1], [0], [0], [1], [0, 0, 1, 1], [], []>} : vector<8x384xbf16>, vector<384x128xbf16>, vector<8x128xf32> -> vector<8x128xf32>
    %c0_9 = arith.constant 0 : index
    %c0_10 = arith.constant 0 : index
    %12 = vector.load %arg5[%c0_9, %c0_10] : memref<1x128xf32, #tpu.memory_space<vmem>>, vector<1x128xf32>
    %13 = vector.broadcast %12 : vector<1x128xf32> to vector<8x128xf32>
    %14 = arith.addf %11, %13 : vector<8x128xf32>
    %cst_11 = arith.constant 0.000000e+00 : f32
    %15 = vector.broadcast %cst_11 : f32 to vector<8x128xf32>
    %16 = arith.maximumf %14, %15 : vector<8x128xf32>
    %c0_12 = arith.constant 0 : index
    %c0_13 = arith.constant 0 : index
    %17 = vector.load %arg6[%c0_12, %c0_13] : memref<8x128xf32, #tpu.memory_space<vmem>>, vector<8x128xf32>
    %cst_14 = arith.constant dense<0.000000e+00> : vector<8x8xf32>
    %18 = tpu.matmul %17, %16, %cst_14 {dimension_numbers = #tpu.dot_dimension_numbers<[1], [1], [0], [0], [0, 0, 1, 0], [], []>} : vector<8x128xf32>, vector<8x128xf32>, vector<8x8xf32> -> vector<8x8xf32>
    %cst_15 = arith.constant dense<0.000000e+00> : vector<8xf32>
    %19 = vector.multi_reduction <add>, %18, %cst_15 [0] : vector<8x8xf32> to vector<8xf32>
    %20 = vector.shape_cast %19 : vector<8xf32> to vector<1x8xf32>
    %c0_16 = arith.constant 0 : index
    %c0_17 = arith.constant 0 : index
    %21 = memref.load %arg7[%c0_16, %c0_17] : memref<1x1xf32, #tpu.memory_space<smem>>
    %22 = vector.broadcast %21 : f32 to vector<1x8xf32>
    %23 = arith.addf %20, %22 : vector<1x8xf32>
    %24 = arith.negf %23 : vector<1x8xf32>
    %25 = math.exp %24 : vector<1x8xf32>
    %cst_18 = arith.constant 1.000000e+00 : f32
    %26 = vector.broadcast %cst_18 : f32 to vector<1x8xf32>
    %27 = arith.addf %26, %25 : vector<1x8xf32>
    %28 = arith.divf %26, %27 : vector<1x8xf32>
    %29 = vector.shape_cast %28 : vector<1x8xf32> to vector<1x1x8xf32>
    %c0_19 = arith.constant 0 : index
    %c0_20 = arith.constant 0 : index
    %c0_21 = arith.constant 0 : index
    %30 = vector.load %arg8[%c0_19, %c0_20, %c0_21] : memref<1x1x8xf32, #tpu.memory_space<vmem>>, vector<1x1x8xf32>
    tpu.vector_store %arg8[%c0_19, %c0_20, %c0_21], %29 {strides = array<i32>} : memref<1x1x8xf32, #tpu.memory_space<vmem>>, vector<1x1x8xf32>,
    return
  }
  func.func @transform_0(%arg0: i32) -> (i32, i32) {
    %c0_i32 = arith.constant 0 : i32
    %c0_i32_0 = arith.constant 0 : i32
    return %arg0, %c0_i32 : i32, i32
  }
  func.func @transform_1(%arg0: i32) -> (i32, i32) {
    %c0_i32 = arith.constant 0 : i32
    %c0_i32_0 = arith.constant 0 : i32
    %c0_i32_1 = arith.constant 0 : i32
    return %c0_i32, %c0_i32_0 : i32, i32
  }
  func.func @transform_2(%arg0: i32) -> (i32, i32) {
    %c0_i32 = arith.constant 0 : i32
    %c0_i32_0 = arith.constant 0 : i32
    %c0_i32_1 = arith.constant 0 : i32
    return %c0_i32, %c0_i32_0 : i32, i32
  }
  func.func @transform_3(%arg0: i32) -> (i32, i32) {
    %c0_i32 = arith.constant 0 : i32
    %c0_i32_0 = arith.constant 0 : i32
    %c0_i32_1 = arith.constant 0 : i32
    return %c0_i32, %c0_i32_0 : i32, i32
  }
  func.func @transform_4(%arg0: i32) -> (i32, i32) {
    %c0_i32 = arith.constant 0 : i32
    %c0_i32_0 = arith.constant 0 : i32
    %c0_i32_1 = arith.constant 0 : i32
    return %c0_i32, %c0_i32_0 : i32, i32
  }
  func.func @transform_5(%arg0: i32) -> (i32, i32) {
    %c0_i32 = arith.constant 0 : i32
    %c0_i32_0 = arith.constant 0 : i32
    %c0_i32_1 = arith.constant 0 : i32
    return %c0_i32, %c0_i32_0 : i32, i32
  }
  func.func @transform_6(%arg0: i32) -> (i32, i32) {
    %c0_i32 = arith.constant 0 : i32
    %c0_i32_0 = arith.constant 0 : i32
    %c0_i32_1 = arith.constant 0 : i32
    return %c0_i32, %c0_i32_0 : i32, i32
  }
  func.func @transform_7(%arg0: i32) -> (i32, i32, i32) {
    %c0_i32 = arith.constant 0 : i32
    %c0_i32_0 = arith.constant 0 : i32
    %c0_i32_1 = arith.constant 0 : i32
    return %arg0, %c0_i32, %c0_i32_0 : i32, i32, i32
  }
}

</mosaic_0001>

<llo_original>
// kernel: net_forward.1
$region0: #{net_forward.1}
  #allocation0 [shape = 'u32[]', space=smem, size = 0x4, offset = 0x4, fixed_abs, tag = 'smem constant byte address 0x4 - core index']
  #allocation1 [shape = 'u32[72,128]{1,0:T(1,128)}', space=vmem, size = 0x9000, scoped, tag = 'internal scratch']
  #allocation2 [shape = 'f32[1,1]{1,0:T(1,128)S(6)}', space=smem, size = 0x200, scoped, tag = 'scoped memory for net_forward.1']
  %s0 = inlined_call_operand.hbm [shape: f32[32,136], index: 0, kind: input, shape index: {}]
  %s1 = inlined_call_operand.hbm [shape: bf16[136,384], index: 1, kind: input, shape index: {}]
  %s2 = inlined_call_operand.vmem [shape: f32[1,384], index: 2, kind: input, shape index: {}]
  %s3 = inlined_call_operand.hbm [shape: bf16[384,128], index: 3, kind: input, shape index: {}]
  %s4 = inlined_call_operand.vmem [shape: f32[1,128], index: 4, kind: input, shape index: {}]
  %s5 = inlined_call_operand.hbm [shape: f32[8,128], index: 5, kind: input, shape index: {}]
  %s6 = inlined_call_operand.<no memory space> [shape: f32[1,1], index: 6, kind: input, shape index: {}]
  %s7 = inlined_call_operand.vmem [shape: f32[4,1,8], index: 7, kind: output, shape index: {}]
  %s8 = sld [smem:[#allocation0]]
  $region77: #{net_forward.1} parent=0
    _
  %s10 = ssub.s32 1, %s8
  %s11 = scalar_select 0, %s10, %s8
  %12 = sst [smem:[#allocation2]] %s6
  $region1: #{net_forward.1} parent=0
    #allocation3 [shape = 'u8[16384]{0}', space=vmem, size = 0x4000, scoped, tag = 'input window, operand 0']
    #allocation4 [shape = 's32[2]{0}', space=sflag, size = 0x8, scoped, tag = 'scoped memory for net_forward.1']
    #allocation5 [shape = 'u8[104448]{0}', space=vmem, size = 0x19800, scoped, tag = 'input window, operand 1, single buffered']
    #allocation6 [shape = 's32[1]{0}', space=sflag, size = 0x4, scoped, tag = 'scoped memory for net_forward.1']
    #allocation7 [shape = 'u8[98304]{0}', space=vmem, size = 0x18000, scoped, tag = 'input window, operand 3, single buffered']
    #allocation8 [shape = 'u8[4096]{0}', space=vmem, size = 0x1000, scoped, tag = 'input window, operand 5, single buffered']
    #allocation9 [shape = 's32[1]{0}', space=sflag, size = 0x4, scoped, tag = 'scoped memory for net_forward.1']
    %13 = vsyncpa [#allocation4], 0
    %s14 = scalar_lea.sflag [#allocation4], 1
    %15 = vsyncpa %s14, 0
    %16 = vsyncpa [#allocation6], 0
    %17 = vsyncpa [#allocation9], 0
    loop: start=0, step=1, limit=6
    $region2: #{net_forward.1} parent=1 // loop_pre_header
      _
    $region3: #{net_forward.1} parent=1 // loop_header
      %s19 = sphi 0, %s23
      %p20 = scmp.ge.s32.totalorder %s19, 6
      %s29 = sphi 0, %s31
      %s32 = sphi 0, %s29
      %s33 = sphi 0, %s32
      %s49 = sphi 0, %s33
      %s53 = sphi 0, %s53
      %s55 = sphi 0, %s53
      %s56 = sphi 0, %s55
      %s70 = sphi 0, %s56
      %s74 = sphi 0, %s74
      %s76 = sphi 0, %s74
      %s77 = sphi 0, %s76
      %s91 = sphi 0, %s77
      %s95 = sphi 0, %s95
      %s97 = sphi 0, %s95
      %s98 = sphi 0, %s97
      %s112 = sphi 0, %s98
      %s116 = sphi 0, %s116
      %s118 = sphi 0, %s116
      %s119 = sphi 0, %s118
      %s133 = sphi 0, %s119
      %s137 = sphi 0, %s137
      %s139 = sphi 0, %s137
      %s140 = sphi 0, %s139
      %s154 = sphi 0, %s140
      %s158 = sphi 0, %s158
      %s160 = sphi 0, %s158
      %s161 = sphi 0, %s160
      %s175 = sphi 0, %s161
      %s181 = sphi 0, %s183
      %s184 = sphi 0, %s181
      %s185 = sphi 0, %s184
      %s201 = sphi 0, %s185
    $region4: #{net_forward.1} parent=1 // loop_header_branch
      %22 = sbr.rel (%p20) target = $region8
    $region5: #{net_forward.1} parent=1 // loop_body
      %s24 = ssub.s32 %s19, 1
      %s25 = ssub.s32 %s19, 2
      %s26 = sadd.s32 %s19, 1
      %s27 = ssub.s32 %s19, %s26
      %p28 = scmp.eq.s32.totalorder %s27, 0
      %s30 = sadd.s32 %s29, 1
      %s31 = scalar_select %p28, %s29, %s30
      %p34 = pneg %p28
      %p35 = scmp.eq.s32.totalorder %s19, 3
      %p36 = por %p34, %p35
      %p37 = scmp.ne.s32.totalorder %s29, %s32
      %p38 = scmp.eq.s32.totalorder %s19, 0
      %p39 = por %p37, %p38
      %p40 = scmp.ne.s32.totalorder %s29, %s32
      %p41 = scmp.eq.s32.totalorder %s24, 3
      %p42 = por %p40, %p41
      %p43 = scmp.ne.s32.totalorder %s32, %s33
      %p44 = scmp.eq.s32.totalorder %s24, 0
      %p45 = por %p43, %p44
      %p46 = scmp.ne.s32.totalorder %s32, %s33
      %p47 = scmp.eq.s32.totalorder %s25, 3
      %p48 = por %p46, %p47
      %p50 = scmp.ne.s32.totalorder %s33, %s49
      %p51 = scmp.eq.s32.totalorder %s25, 0
      %p52 = por %p50, %p51
      %s54 = sadd.s32 %s53, 1
      %p57 = scmp.eq.s32.totalorder %s19, 3
      %p58 = scmp.ne.s32.totalorder %s53, %s55
      %p59 = scmp.eq.s32.totalorder %s19, 0
      %p60 = por %p58, %p59
      %p61 = scmp.ne.s32.totalorder %s53, %s55
      %p62 = scmp.eq.s32.totalorder %s24, 3
      %p63 = por %p61, %p62
      %p64 = scmp.ne.s32.totalorder %s55, %s56
      %p65 = scmp.eq.s32.totalorder %s24, 0
      %p66 = por %p64, %p65
      %p67 = scmp.ne.s32.totalorder %s55, %s56
      %p68 = scmp.eq.s32.totalorder %s25, 3
      %p69 = por %p67, %p68
      %p71 = scmp.ne.s32.totalorder %s56, %s70
      %p72 = scmp.eq.s32.totalorder %s25, 0
      %p73 = por %p71, %p72
      %s75 = sadd.s32 %s74, 1
      %p78 = scmp.eq.s32.totalorder %s19, 3
      %p79 = scmp.ne.s32.totalorder %s74, %s76
      %p80 = scmp.eq.s32.totalorder %s19, 0
      %p81 = por %p79, %p80
      %p82 = scmp.ne.s32.totalorder %s74, %s76
      %p83 = scmp.eq.s32.totalorder %s24, 3
      %p84 = por %p82, %p83
      %p85 = scmp.ne.s32.totalorder %s76, %s77
      %p86 = scmp.eq.s32.totalorder %s24, 0
      %p87 = por %p85, %p86
      %p88 = scmp.ne.s32.totalorder %s76, %s77
      %p89 = scmp.eq.s32.totalorder %s25, 3
      %p90 = por %p88, %p89
      %p92 = scmp.ne.s32.totalorder %s77, %s91
      %p93 = scmp.eq.s32.totalorder %s25, 0
      %p94 = por %p92, %p93
      %s96 = sadd.s32 %s95, 1
      %p99 = scmp.eq.s32.totalorder %s19, 3
      %p100 = scmp.ne.s32.totalorder %s95, %s97
      %p101 = scmp.eq.s32.totalorder %s19, 0
      %p102 = por %p100, %p101
      %p103 = scmp.ne.s32.totalorder %s95, %s97
      %p104 = scmp.eq.s32.totalorder %s24, 3
      %p105 = por %p103, %p104
      %p106 = scmp.ne.s32.totalorder %s97, %s98
      %p107 = scmp.eq.s32.totalorder %s24, 0
      %p108 = por %p106, %p107
      %p109 = scmp.ne.s32.totalorder %s97, %s98
      %p110 = scmp.eq.s32.totalorder %s25, 3
      %p111 = por %p109, %p110
      %p113 = scmp.ne.s32.totalorder %s98, %s112
      %p114 = scmp.eq.s32.totalorder %s25, 0
      %p115 = por %p113, %p114
      %s117 = sadd.s32 %s116, 1
      %p120 = scmp.eq.s32.totalorder %s19, 3
      %p121 = scmp.ne.s32.totalorder %s116, %s118
      %p122 = scmp.eq.s32.totalorder %s19, 0
      %p123 = por %p121, %p122
      %p124 = scmp.ne.s32.totalorder %s116, %s118
      %p125 = scmp.eq.s32.totalorder %s24, 3
      %p126 = por %p124, %p125
      %p127 = scmp.ne.s32.totalorder %s118, %s119
      %p128 = scmp.eq.s32.totalorder %s24, 0
      %p129 = por %p127, %p128
      %p130 = scmp.ne.s32.totalorder %s118, %s119
      %p131 = scmp.eq.s32.totalorder %s25, 3
      %p132 = por %p130, %p131
      %p134 = scmp.ne.s32.totalorder %s119, %s133
      %p135 = scmp.eq.s32.totalorder %s25, 0
      %p136 = por %p134, %p135
      %s138 = sadd.s32 %s137, 1
      %p141 = scmp.eq.s32.totalorder %s19, 3
      %p142 = scmp.ne.s32.totalorder %s137, %s139
      %p143 = scmp.eq.s32.totalorder %s19, 0
      %p144 = por %p142, %p143
      %p145 = scmp.ne.s32.totalorder %s137, %s139
      %p146 = scmp.eq.s32.totalorder %s24, 3
      %p147 = por %p145, %p146
      %p148 = scmp.ne.s32.totalorder %s139, %s140
      %p149 = scmp.eq.s32.totalorder %s24, 0
      %p150 = por %p148, %p149
      %p151 = scmp.ne.s32.totalorder %s139, %s140
      %p152 = scmp.eq.s32.totalorder %s25, 3
      %p153 = por %p151, %p152
      %p155 = scmp.ne.s32.totalorder %s140, %s154
      %p156 = scmp.eq.s32.totalorder %s25, 0
      %p157 = por %p155, %p156
      %s159 = sadd.s32 %s158, 1
      %p162 = scmp.eq.s32.totalorder %s19, 3
      %p163 = scmp.ne.s32.totalorder %s158, %s160
      %p164 = scmp.eq.s32.totalorder %s19, 0
      %p165 = por %p163, %p164
      %p166 = scmp.ne.s32.totalorder %s158, %s160
      %p167 = scmp.eq.s32.totalorder %s24, 3
      %p168 = por %p166, %p167
      %p169 = scmp.ne.s32.totalorder %s160, %s161
      %p170 = scmp.eq.s32.totalorder %s24, 0
      %p171 = por %p169, %p170
      %p172 = scmp.ne.s32.totalorder %s160, %s161
      %p173 = scmp.eq.s32.totalorder %s25, 3
      %p174 = por %p172, %p173
      %p176 = scmp.ne.s32.totalorder %s161, %s175
      %p177 = scmp.eq.s32.totalorder %s25, 0
      %p178 = por %p176, %p177
      %s179 = ssub.s32 %s19, %s26
      %p180 = scmp.eq.s32.totalorder %s179, 0
      %s182 = sadd.s32 %s181, 1
      %s183 = scalar_select %p180, %s181, %s182
      %p186 = pneg %p180
      %p187 = scmp.eq.s32.totalorder %s19, 3
      %p188 = por %p186, %p187
      %p189 = scmp.ne.s32.totalorder %s181, %s184
      %p190 = scmp.eq.s32.totalorder %s19, 0
      %p191 = por %p189, %p190
      %p192 = scmp.ne.s32.totalorder %s181, %s184
      %p193 = scmp.eq.s32.totalorder %s24, 3
      %p194 = por %p192, %p193
      %p195 = scmp.ne.s32.totalorder %s184, %s185
      %p196 = scmp.eq.s32.totalorder %s24, 0
      %p197 = por %p195, %p196
      %p198 = scmp.ne.s32.totalorder %s184, %s185
      %p199 = scmp.eq.s32.totalorder %s25, 3
      %p200 = por %p198, %p199
      %p202 = scmp.ne.s32.totalorder %s185, %s201
      %p203 = scmp.eq.s32.totalorder %s25, 0
      %p204 = por %p202, %p203
      %p205 = scmp.le.s32.totalorder 1, %s19
      %p206 = scmp.lt.s32.totalorder %s19, 5
      %p207 = pnand %p205, %p206
      %p208 = pneg %p207
      // Predicated region
      $region9: #{net_forward.1} parent=5 // pred_check
        _
      $region10: #{net_forward.1} parent=5 // pred_check_branch
        %210 = sbr.rel (%p207) target = $region12
      $region11: #{net_forward.1} parent=5 // pred_region
        %s211 = ssub.s32 %s19, 1
        // Predicated region
        $region13: #{net_forward.1} parent=11 // pred_check
          %p212 = pneg %p66
        $region14: #{net_forward.1} parent=11 // pred_check_branch
          %214 = sbr.rel (%p212) target = $region16
        $region15: #{net_forward.1} parent=11 // pred_region
          %216 = vsyncadd [#allocation6], 0
          %s217 = sshll.u32 %s1, 4
          %s218 = int_to_ptr.hbm [resolvable:$true] %s217
          %s219 = sshll.u32 [#allocation5], 4
          %s220 = int_to_ptr.vmem [resolvable:$true] %s219
          %225 = dma.hbm_to_vmem [thread:$0]  %s218, 3264, %s220, [#allocation6], 192, 192, 12
        $region16: #{net_forward.1} parent=11 // pred_fallthru
          _
        // Predicated region
        $region17: #{net_forward.1} parent=11 // pred_check
          %p226 = pneg %p87
        $region18: #{net_forward.1} parent=11 // pred_check_branch
          %228 = sbr.rel (%p226) target = $region20
        $region19: #{net_forward.1} parent=11 // pred_region
          _
        $region20: #{net_forward.1} parent=11 // pred_fallthru
          _
        // Predicated region
        $region21: #{net_forward.1} parent=11 // pred_check
          %p229 = pneg %p108
        $region22: #{net_forward.1} parent=11 // pred_check_branch
          %231 = sbr.rel (%p229) target = $region24
        $region23: #{net_forward.1} parent=11 // pred_region
          %233 = vsyncadd [#allocation6], 0
          %s234 = sshll.u32 %s3, 4
          %s235 = int_to_ptr.hbm [resolvable:$true] %s234
          %s236 = sshll.u32 [#allocation7], 4
          %s237 = int_to_ptr.vmem [resolvable:$true] %s236
          %242 = dma.hbm_to_vmem [thread:$0]  %s235, 3072, %s237, [#allocation6], 64, 64, 4
        $region24: #{net_forward.1} parent=11 // pred_fallthru
          _
        // Predicated region
        $region25: #{net_forward.1} parent=11 // pred_check
          %p243 = pneg %p129
        $region26: #{net_forward.1} parent=11 // pred_check_branch
          %245 = sbr.rel (%p243) target = $region28
        $region27: #{net_forward.1} parent=11 // pred_region
          _
        $region28: #{net_forward.1} parent=11 // pred_fallthru
          _
        // Predicated region
        $region29: #{net_forward.1} parent=11 // pred_check
          %p246 = pneg %p150
        $region30: #{net_forward.1} parent=11 // pred_check_branch
          %248 = sbr.rel (%p246) target = $region32
        $region31: #{net_forward.1} parent=11 // pred_region
          %250 = vsyncadd [#allocation9], 0
          %s252 = sshll.u32 %s5, 4
          %s253 = int_to_ptr.hbm [resolvable:$true] %s252
          %s254 = sshll.u32 [#allocation8], 4
          %s255 = int_to_ptr.vmem [resolvable:$true] %s254
          %257 = dma.hbm_to_vmem [thread:$0]  %s253, 128, %s255, [#allocation9]
        $region32: #{net_forward.1} parent=11 // pred_fallthru
          _
        // Predicated region
        $region33: #{net_forward.1} parent=11 // pred_check
          %p258 = pneg %p171
        $region34: #{net_forward.1} parent=11 // pred_check_branch
          %260 = sbr.rel (%p258) target = $region36
        $region35: #{net_forward.1} parent=11 // pred_region
          _
        $region36: #{net_forward.1} parent=11 // pred_fallthru
          _
      $region12: #{net_forward.1} parent=5 // pred_fallthru
        _
      %p261 = scmp.lt.s32.totalorder %s19, 4
      // Predicated region
      $region37: #{net_forward.1} parent=5 // pred_check
        %p262 = pneg %p261
      $region38: #{net_forward.1} parent=5 // pred_check_branch
        %264 = sbr.rel (%p262) target = $region40
      $region39: #{net_forward.1} parent=5 // pred_region
        // Predicated region
        $region41: #{net_forward.1} parent=39 // pred_check
          %p265 = pneg %p39
        $region42: #{net_forward.1} parent=39 // pred_check_branch
          %267 = sbr.rel (%p265) target = $region44
        $region43: #{net_forward.1} parent=39 // pred_region
          %s268 = sand.u32 %s29, 1
          %s269 = scalar_lea.sflag [#allocation4], %s268
          %s270 = sand.u32 %s29, 1
          %s271 = smul.addr %s270, 16
          %s272 = scalar_lea.vmem [#allocation3], %s271
          %274 = vsyncadd %s269, 0
          %s275 = smul.addr %s19, 2
          %s276 = smul.addr %s275, 8
          %s277 = scalar_lea.hbm %s0, %s276
          %s279 = sshll.u32 %s277, 4
          %s280 = int_to_ptr.hbm [resolvable:$true] %s279
          %s281 = sshll.u32 %s272, 4
          %s282 = int_to_ptr.vmem [resolvable:$true] %s281
          %284 = dma.hbm_to_vmem [thread:$0]  %s280, 256, %s282, %s269
        $region44: #{net_forward.1} parent=39 // pred_fallthru
          _
      $region40: #{net_forward.1} parent=5 // pred_fallthru
        _
      %p285 = scmp.le.s32.totalorder 1, %s19
      %p286 = scmp.lt.s32.totalorder %s19, 5
      %p287 = pnand %p285, %p286
      %p288 = pneg %p287
      // Predicated region
      $region45: #{net_forward.1} parent=5 // pred_check
        _
      $region46: #{net_forward.1} parent=5 // pred_check_branch
        %290 = sbr.rel (%p287) target = $region48
      $region47: #{net_forward.1} parent=5 // pred_region
        %s291 = ssub.s32 %s19, 1
        %s292 = sand.u32 %s32, 1
        %s293 = scalar_lea.sflag [#allocation4], %s292
        %s294 = sand.u32 %s32, 1
        %s295 = smul.addr %s294, 16
        %s296 = scalar_lea.vmem [#allocation3], %s295
        // Predicated region
        $region49: #{net_forward.1} parent=47 // pred_check
          %p297 = pneg %p45
        $region50: #{net_forward.1} parent=47 // pred_check_branch
          %299 = sbr.rel (%p297) target = $region52
        $region51: #{net_forward.1} parent=47 // pred_region
          %301 = dma.done %s293, 256
        $region52: #{net_forward.1} parent=47 // pred_fallthru
          _
        // Predicated region
        $region53: #{net_forward.1} parent=47 // pred_check
          %p302 = pneg %p66
        $region54: #{net_forward.1} parent=47 // pred_check_branch
          %304 = sbr.rel (%p302) target = $region56
        $region55: #{net_forward.1} parent=47 // pred_region
          %306 = dma.done [#allocation6], 3264
        $region56: #{net_forward.1} parent=47 // pred_fallthru
          _
        // Predicated region
        $region57: #{net_forward.1} parent=47 // pred_check
          %p307 = pneg %p108
        $region58: #{net_forward.1} parent=47 // pred_check_branch
          %309 = sbr.rel (%p307) target = $region60
        $region59: #{net_forward.1} parent=47 // pred_region
          %311 = dma.done [#allocation6], 3072
        $region60: #{net_forward.1} parent=47 // pred_fallthru
          _
        // Predicated region
        $region61: #{net_forward.1} parent=47 // pred_check
          %p312 = pneg %p150
        $region62: #{net_forward.1} parent=47 // pred_check_branch
          %314 = sbr.rel (%p312) target = $region64
        $region63: #{net_forward.1} parent=47 // pred_region
          %316 = dma.done [#allocation9], 128
        $region64: #{net_forward.1} parent=47 // pred_fallthru
          _
        %s317 = sand.u32 %s32, 1
        %s318 = scalar_lea.sflag [#allocation4], %s317
        %s319 = sand.u32 %s32, 1
        %s320 = smul.addr %s319, 16
        %s321 = scalar_lea.vmem [#allocation3], %s320
        %p322 = pneg %p45
        %p323 = pneg %p42
        %p324 = pneg %p66
        %p325 = pneg %p63
        %p326 = pneg %p87
        %p327 = pneg %p84
        %p328 = pneg %p108
        %p329 = pneg %p105
        %p330 = pneg %p129
        %p331 = pneg %p126
        %p332 = pneg %p150
        %p333 = pneg %p147
        %p334 = pneg %p171
        %p335 = pneg %p168
        %p336 = pneg %p197
        %p337 = pneg %p194
        %p338 = scmp.lt.s32.totalorder %s24, 3
        %s339 = scalar_select %p338, %s24, 3
        %s340 = scalar_lea.vmem %s7, %s339
        %p341 = scmp.lt.s32.totalorder %s24, 3
        %s342 = scalar_select %p341, %s24, 3
        %s343 = scalar_lea.vmem %s7, %s342
        %v345 = vld [vmem:[%s296] sm:$0xff]
        %v346 = vld [vmem:[%s296 + $0x8] sm:$0xff]
        %v347 = vpack.c.bf16 %v345, %v345
        %v348 = vpack.c.bf16 %v346, %v346
        %v349 = vld [vmem:[#allocation5] sm:$0xff]
        %v350 = vld [vmem:[#allocation5 + $0x8] sm:$0xf]
        %v351 = vld [vmem:[#allocation5 + $0xc] sm:$0xff]
        %v352 = vld [vmem:[#allocation5 + $0x14] sm:$0xf]
        %v353 = vld [vmem:[#allocation5 + $0x18] sm:$0xff]
        %v354 = vld [vmem:[#allocation5 + $0x20] sm:$0xf]
        %v355 = vld [vmem:[#allocation5 + $0x24] sm:$0xff]
        %v356 = vld [vmem:[#allocation5 + $0x2c] sm:$0xf]
        %v357 = vld [vmem:[#allocation5 + $0x30] sm:$0xff]
        %v358 = vld [vmem:[#allocation5 + $0x38] sm:$0xf]
        %v359 = vld [vmem:[#allocation5 + $0x3c] sm:$0xff]
        %v360 = vld [vmem:[#allocation5 + $0x44] sm:$0xf]
        %v361 = vld [vmem:[#allocation5 + $0x48] sm:$0xff]
        %v362 = vld [vmem:[#allocation5 + $0x50] sm:$0xf]
        %v363 = vld [vmem:[#allocation5 + $0x54] sm:$0xff]
        %v364 = vld [vmem:[#allocation5 + $0x5c] sm:$0xf]
        %v365 = vld [vmem:[#allocation5 + $0x60] sm:$0xff]
        %v366 = vld [vmem:[#allocation5 + $0x68] sm:$0xf]
        %v367 = vld [vmem:[#allocation5 + $0x6c] sm:$0xff]
        %v368 = vld [vmem:[#allocation5 + $0x74] sm:$0xf]
        %v369 = vld [vmem:[#allocation5 + $0x78] sm:$0xff]
        %v370 = vld [vmem:[#allocation5 + $0x80] sm:$0xf]
        %v371 = vld [vmem:[#allocation5 + $0x84] sm:$0xff]
        %v372 = vld [vmem:[#allocation5 + $0x8c] sm:$0xf]
        %v373 = vld [vmem:[#allocation5 + $0x90] sm:$0xff]
        %v374 = vld [vmem:[#allocation5 + $0x98] sm:$0xf]
        %v375 = vld [vmem:[#allocation5 + $0x9c] sm:$0xff]
        %v376 = vld [vmem:[#allocation5 + $0xa4] sm:$0xf]
        %v377 = vld [vmem:[#allocation5 + $0xa8] sm:$0xff]
        %v378 = vld [vmem:[#allocation5 + $0xb0] sm:$0xf]
        %v379 = vld [vmem:[#allocation5 + $0xb4] sm:$0xff]
        %v380 = vld [vmem:[#allocation5 + $0xbc] sm:$0xf]
        %v381 = vld [vmem:[#allocation5 + $0xc0] sm:$0xff]
        %v382 = vld [vmem:[#allocation5 + $0xc8] sm:$0xf]
        %v383 = vld [vmem:[%s2] sm:$0x7]
        %v385 = vperm.slane %v383, 0
        %v386 = vperm.slane %v383, 1
        %v387 = vperm.slane %v383, 2
        %v425 = vunpack.c.l.b16 %v349
        %v426 = vunpack.c.h.b16 %v349
        %v427 = vunpack.c.l.b16 %v350
        %v428 = vunpack.c.l.b16 %v351
        %v429 = vunpack.c.h.b16 %v351
        %v430 = vunpack.c.l.b16 %v352
        %v431 = vunpack.c.l.b16 %v353
        %v432 = vunpack.c.h.b16 %v353
        %v433 = vunpack.c.l.b16 %v354
        %v434 = vunpack.c.l.b16 %v355
        %v435 = vunpack.c.h.b16 %v355
        %v436 = vunpack.c.l.b16 %v356
        %v437 = vunpack.c.l.b16 %v357
        %v438 = vunpack.c.h.b16 %v357
        %v439 = vunpack.c.l.b16 %v358
        %v440 = vunpack.c.l.b16 %v359
        %v441 = vunpack.c.h.b16 %v359
        %v442 = vunpack.c.l.b16 %v360
        %v443 = vunpack.c.l.b16 %v361
        %v444 = vunpack.c.h.b16 %v361
        %v445 = vunpack.c.l.b16 %v362
        %v446 = vunpack.c.l.b16 %v363
        %v447 = vunpack.c.h.b16 %v363
        %v448 = vunpack.c.l.b16 %v364
        %v449 = vunpack.c.l.b16 %v365
        %v450 = vunpack.c.h.b16 %v365
        %v451 = vunpack.c.l.b16 %v366
        %v452 = vunpack.c.l.b16 %v367
        %v453 = vunpack.c.h.b16 %v367
        %v454 = vunpack.c.l.b16 %v368
        %v455 = vunpack.c.l.b16 %v369
        %v456 = vunpack.c.h.b16 %v369
        %v457 = vunpack.c.l.b16 %v370
        %v458 = vunpack.c.l.b16 %v371
        %v459 = vunpack.c.h.b16 %v371
        %v460 = vunpack.c.l.b16 %v372
        %v461 = vunpack.c.l.b16 %v373
        %v462 = vunpack.c.h.b16 %v373
        %v463 = vunpack.c.l.b16 %v374
        %v464 = vunpack.c.l.b16 %v375
        %v465 = vunpack.c.h.b16 %v375
        %v466 = vunpack.c.l.b16 %v376
        %v467 = vunpack.c.l.b16 %v377
        %v468 = vunpack.c.h.b16 %v377
        %v469 = vunpack.c.l.b16 %v378
        %v470 = vunpack.c.l.b16 %v379
        %v471 = vunpack.c.h.b16 %v379
        %v472 = vunpack.c.l.b16 %v380
        %v473 = vunpack.c.l.b16 %v381
        %v474 = vunpack.c.h.b16 %v381
        %v475 = vunpack.c.l.b16 %v382
        %v476 = vpack.c.b16 %v428, %v425
        %v477 = vpack.c.b16 %v429, %v426
        %v478 = vpack.c.b16 %v430, %v427
        %v479 = vpack.c.b16 %v434, %v431
        %v480 = vpack.c.b16 %v435, %v432
        %v481 = vpack.c.b16 %v436, %v433
        %v482 = vpack.c.b16 %v440, %v437
        %v483 = vpack.c.b16 %v441, %v438
        %v484 = vpack.c.b16 %v442, %v439
        %v485 = vpack.c.b16 %v446, %v443
        %v486 = vpack.c.b16 %v447, %v444
        %v487 = vpack.c.b16 %v448, %v445
        %v488 = vpack.c.b16 %v452, %v449
        %v489 = vpack.c.b16 %v453, %v450
        %v490 = vpack.c.b16 %v454, %v451
        %v491 = vpack.c.b16 %v458, %v455
        %v492 = vpack.c.b16 %v459, %v456
        %v493 = vpack.c.b16 %v460, %v457
        %v494 = vpack.c.b16 %v464, %v461
        %v495 = vpack.c.b16 %v465, %v462
        %v496 = vpack.c.b16 %v466, %v463
        %v497 = vpack.c.b16 %v470, %v467
        %v498 = vpack.c.b16 %v471, %v468
        %v499 = vpack.c.b16 %v472, %v469
        %v500 = vpack.c.b16 %v473, %v473
        %v501 = vpack.c.b16 %v474, %v474
        %v502 = vpack.c.b16 %v475, %v475
        %vm527 = vcmask 64512
        %v529 = vsel %vm527, %v348, 0
        %vm531 = vcmask 1043456
        %v533 = vsel %vm531, %v500, 0
        %v536 = vsel %vm531, %v501, 0
        %v539 = vsel %vm531, %v502, 0
        %541 = vmatpush.bf16.msra.mxu0 %v497
        %542 = vmatpush.bf16.msra.mxu0 %v494
        %543 = vmatpush.bf16.msra.mxu0 %v491
        %544 = vmatpush.bf16.msra.mxu0 %v488
        %545 = vmatpush.bf16.msra.mxu0 %v485
        %546 = vmatpush.bf16.msra.mxu0 %v482
        %547 = vmatpush.bf16.msra.mxu0 %v479
        %548 = vmatpush.bf16.msra.mxu0 %v476
        %549 = vmatmul.bf16.gmra.mxu0 %v347
        %v550 = vpop.f32.mrf.mxu0
        %v551 = vadd.f32 %v385, %v550
        %v552 = vpop.f32.mrf.mxu0
        %553 = vdwg.mxu0
        %554 = vmatpush.bf16.msra.mxu0 0
        %555 = vmatpush.bf16.msra.mxu0 0
        %556 = vmatpush.bf16.msra.mxu0 0
        %557 = vmatpush.bf16.msra.mxu0 0
        %558 = vmatpush.bf16.msra.mxu0 0
        %559 = vmatpush.bf16.msra.mxu0 0
        %560 = vmatpush.bf16.msra.mxu0 0
        %561 = vmatpush.bf16.msra.mxu0 %v533
        %562 = vmatmul.bf16.gmra.mxu0 %v529
        %v563 = vpop.f32.mrf.mxu0
        %v564 = vadd.f32 %v551, %v563
        %v565 = vpop.f32.mrf.mxu0
        %566 = vdwg.mxu0
        %567 = vmatpush.bf16.msra.mxu0 %v498
        %568 = vmatpush.bf16.msra.mxu0 %v495
        %569 = vmatpush.bf16.msra.mxu0 %v492
        %570 = vmatpush.bf16.msra.mxu0 %v489
        %571 = vmatpush.bf16.msra.mxu0 %v486
        %572 = vmatpush.bf16.msra.mxu0 %v483
        %573 = vmatpush.bf16.msra.mxu0 %v480
        %574 = vmatpush.bf16.msra.mxu0 %v477
        %575 = vmatmul.bf16.gmra.mxu0 %v347
        %v576 = vpop.f32.mrf.mxu0
        %v577 = vadd.f32 %v386, %v576
        %v578 = vpop.f32.mrf.mxu0
        %579 = vdwg.mxu0
        %580 = vmatpush.bf16.msra.mxu0 0
        %581 = vmatpush.bf16.msra.mxu0 0
        %582 = vmatpush.bf16.msra.mxu0 0
        %583 = vmatpush.bf16.msra.mxu0 0
        %584 = vmatpush.bf16.msra.mxu0 0
        %585 = vmatpush.bf16.msra.mxu0 0
        %586 = vmatpush.bf16.msra.mxu0 0
        %587 = vmatpush.bf16.msra.mxu0 %v536
        %588 = vmatmul.bf16.gmra.mxu0 %v529
        %v589 = vpop.f32.mrf.mxu0
        %v590 = vadd.f32 %v577, %v589
        %v591 = vpop.f32.mrf.mxu0
        %592 = vdwg.mxu0
        %593 = vmatpush.bf16.msra.mxu0 %v499
        %594 = vmatpush.bf16.msra.mxu0 %v496
        %595 = vmatpush.bf16.msra.mxu0 %v493
        %596 = vmatpush.bf16.msra.mxu0 %v490
        %597 = vmatpush.bf16.msra.mxu0 %v487
        %598 = vmatpush.bf16.msra.mxu0 %v484
        %599 = vmatpush.bf16.msra.mxu0 %v481
        %600 = vmatpush.bf16.msra.mxu0 %v478
        %601 = vmatmul.bf16.gmra.mxu0 %v347
        %v602 = vpop.f32.mrf.mxu0
        %v603 = vadd.f32 %v387, %v602
        %v604 = vpop.f32.mrf.mxu0
        %605 = vdwg.mxu0
        %606 = vmatpush.bf16.msra.mxu0 0
        %607 = vmatpush.bf16.msra.mxu0 0
        %608 = vmatpush.bf16.msra.mxu0 0
        %609 = vmatpush.bf16.msra.mxu0 0
        %610 = vmatpush.bf16.msra.mxu0 0
        %611 = vmatpush.bf16.msra.mxu0 0
        %612 = vmatpush.bf16.msra.mxu0 0
        %613 = vmatpush.bf16.msra.mxu0 %v539
        %614 = vmatmul.bf16.gmra.mxu0 %v529
        %v615 = vpop.f32.mrf.mxu0
        %v616 = vadd.f32 %v603, %v615
        %v617 = vpop.f32.mrf.mxu0
        %618 = vdwg.mxu0
        %v619 = vmax.f32 %v564, 0.0
        %v620 = vmax.f32 %v590, 0.0
        %v621 = vmax.f32 %v616, 0.0
        %v622 = vpack.c.bf16 %v619, %v619
        %v623 = vpack.c.bf16 %v620, %v620
        %v624 = vpack.c.bf16 %v621, %v621
        %v625 = vld [vmem:[#allocation7] sm:$0xf]
        %v626 = vld [vmem:[#allocation7 + $0x4] sm:$0xf]
        %v627 = vld [vmem:[#allocation7 + $0x8] sm:$0xf]
        %v628 = vld [vmem:[#allocation7 + $0xc] sm:$0xf]
        %v629 = vld [vmem:[#allocation7 + $0x10] sm:$0xf]
        %v630 = vld [vmem:[#allocation7 + $0x14] sm:$0xf]
        %v631 = vld [vmem:[#allocation7 + $0x18] sm:$0xf]
        %v632 = vld [vmem:[#allocation7 + $0x1c] sm:$0xf]
        %v633 = vld [vmem:[#allocation7 + $0x20] sm:$0xf]
        %v634 = vld [vmem:[#allocation7 + $0x24] sm:$0xf]
        %v635 = vld [vmem:[#allocation7 + $0x28] sm:$0xf]
        %v636 = vld [vmem:[#allocation7 + $0x2c] sm:$0xf]
        %v637 = vld [vmem:[#allocation7 + $0x30] sm:$0xf]
        %v638 = vld [vmem:[#allocation7 + $0x34] sm:$0xf]
        %v639 = vld [vmem:[#allocation7 + $0x38] sm:$0xf]
        %v640 = vld [vmem:[#allocation7 + $0x3c] sm:$0xf]
        %v641 = vld [vmem:[#allocation7 + $0x40] sm:$0xf]
        %v642 = vld [vmem:[#allocation7 + $0x44] sm:$0xf]
        %v643 = vld [vmem:[#allocation7 + $0x48] sm:$0xf]
        %v644 = vld [vmem:[#allocation7 + $0x4c] sm:$0xf]
        %v645 = vld [vmem:[#allocation7 + $0x50] sm:$0xf]
        %v646 = vld [vmem:[#allocation7 + $0x54] sm:$0xf]
        %v647 = vld [vmem:[#allocation7 + $0x58] sm:$0xf]
        %v648 = vld [vmem:[#allocation7 + $0x5c] sm:$0xf]
        %v649 = vld [vmem:[#allocation7 + $0x60] sm:$0xf]
        %v650 = vld [vmem:[#allocation7 + $0x64] sm:$0xf]
        %v651 = vld [vmem:[#allocation7 + $0x68] sm:$0xf]
        %v652 = vld [vmem:[#allocation7 + $0x6c] sm:$0xf]
        %v653 = vld [vmem:[#allocation7 + $0x70] sm:$0xf]
        %v654 = vld [vmem:[#allocation7 + $0x74] sm:$0xf]
        %v655 = vld [vmem:[#allocation7 + $0x78] sm:$0xf]
        %v656 = vld [vmem:[#allocation7 + $0x7c] sm:$0xf]
        %v657 = vld [vmem:[#allocation7 + $0x80] sm:$0xf]
        %v658 = vld [vmem:[#allocation7 + $0x84] sm:$0xf]
        %v659 = vld [vmem:[#allocation7 + $0x88] sm:$0xf]
        %v660 = vld [vmem:[#allocation7 + $0x8c] sm:$0xf]
        %v661 = vld [vmem:[#allocation7 + $0x90] sm:$0xf]
        %v662 = vld [vmem:[#allocation7 + $0x94] sm:$0xf]
        %v663 = vld [vmem:[#allocation7 + $0x98] sm:$0xf]
        %v664 = vld [vmem:[#allocation7 + $0x9c] sm:$0xf]
        %v665 = vld [vmem:[#allocation7 + $0xa0] sm:$0xf]
        %v666 = vld [vmem:[#allocation7 + $0xa4] sm:$0xf]
        %v667 = vld [vmem:[#allocation7 + $0xa8] sm:$0xf]
        %v668 = vld [vmem:[#allocation7 + $0xac] sm:$0xf]
        %v669 = vld [vmem:[#allocation7 + $0xb0] sm:$0xf]
        %v670 = vld [vmem:[#allocation7 + $0xb4] sm:$0xf]
        %v671 = vld [vmem:[#allocation7 + $0xb8] sm:$0xf]
        %v672 = vld [vmem:[#allocation7 + $0xbc] sm:$0xf]
        %v673 = vld [vmem:[%s4] sm:$0x1]
        %v675 = vperm.slane %v673, 0
        %v725 = vunpack.c.l.b16 %v625
        %v726 = vunpack.c.l.b16 %v626
        %v727 = vunpack.c.l.b16 %v627
        %v728 = vunpack.c.l.b16 %v628
        %v729 = vunpack.c.l.b16 %v629
        %v730 = vunpack.c.l.b16 %v630
        %v731 = vunpack.c.l.b16 %v631
        %v732 = vunpack.c.l.b16 %v632
        %v733 = vunpack.c.l.b16 %v633
        %v734 = vunpack.c.l.b16 %v634
        %v735 = vunpack.c.l.b16 %v635
        %v736 = vunpack.c.l.b16 %v636
        %v737 = vunpack.c.l.b16 %v637
        %v738 = vunpack.c.l.b16 %v638
        %v739 = vunpack.c.l.b16 %v639
        %v740 = vunpack.c.l.b16 %v640
        %v741 = vunpack.c.l.b16 %v641
        %v742 = vunpack.c.l.b16 %v642
        %v743 = vunpack.c.l.b16 %v643
        %v744 = vunpack.c.l.b16 %v644
        %v745 = vunpack.c.l.b16 %v645
        %v746 = vunpack.c.l.b16 %v646
        %v747 = vunpack.c.l.b16 %v647
        %v748 = vunpack.c.l.b16 %v648
        %v749 = vunpack.c.l.b16 %v649
        %v750 = vunpack.c.l.b16 %v650
        %v751 = vunpack.c.l.b16 %v651
        %v752 = vunpack.c.l.b16 %v652
        %v753 = vunpack.c.l.b16 %v653
        %v754 = vunpack.c.l.b16 %v654
        %v755 = vunpack.c.l.b16 %v655
        %v756 = vunpack.c.l.b16 %v656
        %v757 = vunpack.c.l.b16 %v657
        %v758 = vunpack.c.l.b16 %v658
        %v759 = vunpack.c.l.b16 %v659
        %v760 = vunpack.c.l.b16 %v660
        %v761 = vunpack.c.l.b16 %v661
        %v762 = vunpack.c.l.b16 %v662
        %v763 = vunpack.c.l.b16 %v663
        %v764 = vunpack.c.l.b16 %v664
        %v765 = vunpack.c.l.b16 %v665
        %v766 = vunpack.c.l.b16 %v666
        %v767 = vunpack.c.l.b16 %v667
        %v768 = vunpack.c.l.b16 %v668
        %v769 = vunpack.c.l.b16 %v669
        %v770 = vunpack.c.l.b16 %v670
        %v771 = vunpack.c.l.b16 %v671
        %v772 = vunpack.c.l.b16 %v672
        %v773 = vpack.c.b16 %v726, %v725
        %v774 = vpack.c.b16 %v728, %v727
        %v775 = vpack.c.b16 %v730, %v729
        %v776 = vpack.c.b16 %v732, %v731
        %v777 = vpack.c.b16 %v734, %v733
        %v778 = vpack.c.b16 %v736, %v735
        %v779 = vpack.c.b16 %v738, %v737
        %v780 = vpack.c.b16 %v740, %v739
        %v781 = vpack.c.b16 %v742, %v741
        %v782 = vpack.c.b16 %v744, %v743
        %v783 = vpack.c.b16 %v746, %v745
        %v784 = vpack.c.b16 %v748, %v747
        %v785 = vpack.c.b16 %v750, %v749
        %v786 = vpack.c.b16 %v752, %v751
        %v787 = vpack.c.b16 %v754, %v753
        %v788 = vpack.c.b16 %v756, %v755
        %v789 = vpack.c.b16 %v758, %v757
        %v790 = vpack.c.b16 %v760, %v759
        %v791 = vpack.c.b16 %v762, %v761
        %v792 = vpack.c.b16 %v764, %v763
        %v793 = vpack.c.b16 %v766, %v765
        %v794 = vpack.c.b16 %v768, %v767
        %v795 = vpack.c.b16 %v770, %v769
        %v796 = vpack.c.b16 %v772, %v771
        %821 = vmatpush.bf16.msra.mxu0 %v780
        %822 = vmatpush.bf16.msra.mxu0 %v779
        %823 = vmatpush.bf16.msra.mxu0 %v778
        %824 = vmatpush.bf16.msra.mxu0 %v777
        %825 = vmatpush.bf16.msra.mxu0 %v776
        %826 = vmatpush.bf16.msra.mxu0 %v775
        %827 = vmatpush.bf16.msra.mxu0 %v774
        %828 = vmatpush.bf16.msra.mxu0 %v773
        %829 = vmatmul.bf16.gmra.mxu0 %v622
        %v830 = vpop.f32.mrf.mxu0
        %v831 = vadd.f32 %v675, %v830
        %v832 = vpop.f32.mrf.mxu0
        %833 = vdwg.mxu0
        %834 = vmatpush.bf16.msra.mxu0 %v788
        %835 = vmatpush.bf16.msra.mxu0 %v787
        %836 = vmatpush.bf16.msra.mxu0 %v786
        %837 = vmatpush.bf16.msra.mxu0 %v785
        %838 = vmatpush.bf16.msra.mxu0 %v784
        %839 = vmatpush.bf16.msra.mxu0 %v783
        %840 = vmatpush.bf16.msra.mxu0 %v782
        %841 = vmatpush.bf16.msra.mxu0 %v781
        %842 = vmatmul.bf16.gmra.mxu0 %v623
        %v843 = vpop.f32.mrf.mxu0
        %v844 = vadd.f32 %v831, %v843
        %v845 = vpop.f32.mrf.mxu0
        %846 = vdwg.mxu0
        %847 = vmatpush.bf16.msra.mxu0 %v796
        %848 = vmatpush.bf16.msra.mxu0 %v795
        %849 = vmatpush.bf16.msra.mxu0 %v794
        %850 = vmatpush.bf16.msra.mxu0 %v793
        %851 = vmatpush.bf16.msra.mxu0 %v792
        %852 = vmatpush.bf16.msra.mxu0 %v791
        %853 = vmatpush.bf16.msra.mxu0 %v790
        %854 = vmatpush.bf16.msra.mxu0 %v789
        %855 = vmatmul.bf16.gmra.mxu0 %v624
        %v856 = vpop.f32.mrf.mxu0
        %v857 = vadd.f32 %v844, %v856
        %v858 = vpop.f32.mrf.mxu0
        %859 = vdwg.mxu0
        %v860 = vmax.f32 %v857, 0.0
        %v861 = vld [vmem:[#allocation8] sm:$0xff]
        %862 = vmatpush.xpose.msra.mxu0 0.0
        %863 = vmatpush.xpose.msra.mxu0 0.0
        %864 = vmatpush.xpose.msra.mxu0 0.0
        %865 = vmatpush.xpose.msra.mxu0 0.0
        %866 = vmatpush.xpose.msra.mxu0 0.0
        %867 = vmatpush.xpose.msra.mxu0 0.0
        %868 = vmatpush.xpose.msra.mxu0 0.0
        %869 = vmatpush.xpose.msra.mxu0 0.0
        %870 = vmatpush.xpose.msra.mxu0 0.0
        %871 = vmatpush.xpose.msra.mxu0 0.0
        %872 = vmatpush.xpose.msra.mxu0 0.0
        %873 = vmatpush.xpose.msra.mxu0 0.0
        %874 = vmatpush.xpose.msra.mxu0 0.0
        %875 = vmatpush.xpose.msra.mxu0 0.0
        %876 = vmatpush.xpose.msra.mxu0 0.0
        %877 = vmatpush.xpose.msra.mxu0 %v860
        %878 = vmatmul.f32.gmra.mxu0 %v861
        %v879 = vpop.f32.mrf.mxu0
        %v880 = vadd.f32 0.0, %v879
        %881 = vdwg.mxu0
        %v882 = vsel %vm527, %v880, 0.0
        %v883 = vrot.slane %v882, 4
        %v884 = vadd.f32 %v882, %v883
        %v885 = vrot.slane %v884, 2
        %v886 = vadd.f32 %v884, %v885
        %v887 = vrot.slane %v886, 1
        %v888 = vadd.f32 %v886, %v887
        %s889 = sld [smem:[#allocation2]]
        %v890 = vstv %s889
        %v891 = vadd.f32 %v888, %v890
        %v892 = vxor.u32 %v891, 2147483648
        %v893 = vmul.f32 %v892, 1.442695
        %v894 = vpow.pop %v893
        %v895 = vadd.f32 %v894, 1.0
        %v896 = vrcp.pop %v895
        %v897 = vmul.f32 %v895, %v896
        %v898 = vsub.f32 1.0, %v897
        %v899 = vmul.f32 %v896, %v898
        %v900 = vadd.f32 %v896, %v899
        %vm901 = vweird.f32 %v895
        %vm902 = vweird.f32 %v896
        %vm903 = vmor %vm901, %vm902
        %v904 = vsel %vm903, %v896, %v900
        %v905 = vand.u32 2147483647, %v895
        %vm906 = vcmp.eq.f32.partialorder %v905, 8.507059e+37
        %v907 = vand.u32 %v895, 2147483648
        %v908 = vor.u32 1.1754944e-38, %v907
        %v909 = vsel %vm906, %v908, %v904
        %v910 = vmul.f32 1.0, %v909
        %vm911 = vcmask 57344
        %912 = vst.msk [vmem:[%s343] sm:$0x1] %vm911, %v910
        %p913 = scmp.lt.s32.totalorder %s24, 3
        %s914 = scalar_select %p913, %s24, 3
        %s915 = scalar_lea.vmem %s7, %s914
        // Predicated region
        $region65: #{net_forward.1} parent=47 // pred_check
          %p916 = pneg %p194
        $region66: #{net_forward.1} parent=47 // pred_check_branch
          %918 = sbr.rel (%p916) target = $region68
        $region67: #{net_forward.1} parent=47 // pred_region
          _
        $region68: #{net_forward.1} parent=47 // pred_fallthru
          _
      $region48: #{net_forward.1} parent=5 // pred_fallthru
        _
      %p919 = scmp.le.s32.totalorder 2, %s19
      // Predicated region
      $region69: #{net_forward.1} parent=5 // pred_check
        %p920 = pneg %p919
      $region70: #{net_forward.1} parent=5 // pred_check_branch
        %922 = sbr.rel (%p920) target = $region72
      $region71: #{net_forward.1} parent=5 // pred_region
        %s923 = ssub.s32 %s19, 2
        // Predicated region
        $region73: #{net_forward.1} parent=71 // pred_check
          %p924 = pneg %p200
        $region74: #{net_forward.1} parent=71 // pred_check_branch
          %926 = sbr.rel (%p924) target = $region76
        $region75: #{net_forward.1} parent=71 // pred_region
          %p927 = scmp.lt.s32.totalorder %s25, 3
          %s928 = scalar_select %p927, %s25, 3
          %s929 = scalar_lea.vmem %s7, %s928
        $region76: #{net_forward.1} parent=71 // pred_fallthru
          _
      $region72: #{net_forward.1} parent=5 // pred_fallthru
        _
    $region6: #{net_forward.1} parent=1 // loop_footer
      %s23 = sadd.s32 1, %s19
    $region7: #{net_forward.1} parent=1 // loop_footer_branch
      %18 = sbr.rel target = $region3
    $region8: #{net_forward.1} parent=1 // loop_exit
      _
    %930 = vsyncpa [#allocation4], 1
    %s931 = scalar_lea.sflag [#allocation4], 1
    %932 = vsyncpa %s931, 1
    %933 = vsyncpa [#allocation6], 1
    %934 = vsyncpa [#allocation9], 1

</llo_original>
